<compile_context>
chip_gen: v7x
topology: tpu7x:2x2x1
jax: 0.10.0
libtpu: 0.0.40
codegen_flags: <defaults>
</compile_context>

<pallas_src>
import functools

import jax
import jax.numpy as jnp
import numpy as np
from jax.experimental import pallas as pl
from jax.experimental.pallas import tpu as pltpu


def _leaky_relu(x, slope=0.01):
    return jnp.where(x >= 0, x, slope * x)


def _query_gen_kernel(
    y_ref,        # (1, N)      Y samples with cos(i) positional embedding pre-added
    w1_ref,       # (N, 128)    mlp_x layer 1 weight (pre-transposed)
    w2_ref,       # (128, H)    mlp_x layer 2 weight
    w3_ref,       # (H, H)      mlp_x layer 3 weight
    wf_ref,       # (H, dim)    fused diag(gv)·Wv·Wp  (norm_v affine + value + projection)
    vec_ref,      # (8, P)      packed small vectors (biases), P >= 128
    out_ref,      # (dim, dim)  output: the full attention result (all rows identical)
):
    h_dim = w3_ref.shape[0]
    dim = wf_ref.shape[1]

    # Unpack the small-vector slab (static slices -> zero runtime cost).
    b1 = vec_ref[0:1, 0:128]
    b2 = vec_ref[1:2, 0:h_dim]
    b3 = vec_ref[2:3, 0:h_dim]
    bf = vec_ref[3:4, 0:dim]          # fused output bias

    wdt = w1_ref.dtype

    # --- mlp_x applied to Y (the only live branch; Dropout(p=0.0) == identity)
    h = jnp.dot(y_ref[...].astype(wdt), w1_ref[...],
                preferred_element_type=jnp.float32) + b1
    h = _leaky_relu(h)
    h = jnp.dot(h.astype(wdt), w2_ref[...],
                preferred_element_type=jnp.float32) + b2
    h = _leaky_relu(h)
    y_long = jnp.dot(h.astype(wdt), w3_ref[...],
                     preferred_element_type=jnp.float32) + b3        # (1, H)

    # --- norm_v: affine (gv, bv) is folded into wf/bf; only normalize here.
    mean = jnp.mean(y_long, axis=-1, keepdims=True)
    var = jnp.mean((y_long - mean) ** 2, axis=-1, keepdims=True)
    v_norm = (y_long - mean) * jax.lax.rsqrt(var + 1e-5)             # (1, H)

    # --- MultiHeadAttention with a single key/value token ----------------------
    # softmax over the length-1 key axis == 1.0, so every query row of the
    # output equals `LN(y_long) @ Wv @ Wp + ...`, i.e. one fused matmul.
    row = jnp.dot(v_norm.astype(wdt), wf_ref[...],
                  preferred_element_type=jnp.float32) + bf            # (1, dim)

    # All rows of the attention output are identical; write the broadcast
    # directly (avoids a separate XLA broadcast dispatch + HBM row roundtrip).
    out_ref[...] = jnp.broadcast_to(row, out_ref.shape).astype(out_ref.dtype)


def _padded_f32_bytes(shape):
    """Bytes of an f32 array once padded to (8, 128) tiles in VMEM."""
    if len(shape) == 1:
        lead, r, c = 1, 1, shape[0]
    else:
        lead = int(np.prod(shape[:-2])) if len(shape) > 2 else 1
        r, c = shape[-2], shape[-1]
    return lead * (-(-r // 8) * 8) * (-(-c // 128) * 128) * 4


def init_params(key, input_dim, dim, hidden_dim):
    """Deterministic synthetic parameters (PyTorch-Linear-style uniform init)."""
    n = input_dim // 2
    keys = jax.random.split(key, 12)

    def linear(k, fan_in, fan_out):
        k1, k2 = jax.random.split(k)
        bound = 1.0 / np.sqrt(fan_in)
        w = jax.random.uniform(k1, (fan_in, fan_out), jnp.float32, -bound, bound)
        b = jax.random.uniform(k2, (1, fan_out), jnp.float32, -bound, bound)
        return w, b

    p = {}
    # mlp_x (mlp_y exists in __init__ but is unused by the forward -> omitted)
    p["w1"], p["b1"] = linear(keys[0], n, 128)
    p["w2"], p["b2"] = linear(keys[1], 128, hidden_dim)
    p["w3"], p["b3"] = linear(keys[2], hidden_dim, hidden_dim)
    # learned query grid + norm_q + attention query/key projections + norm_k:
    # initialized for completeness but mathematically dead (see header note).
    p["query"] = jax.random.normal(keys[3], (dim, dim), jnp.float32)
    p["gq"], p["bq"] = jnp.ones((1, dim)), jnp.zeros((1, dim))
    p["wq"], p["bq_lin"] = linear(keys[4], dim, dim)
    p["wk"], p["bk_lin"] = linear(keys[5], hidden_dim, dim)
    p["gk"], p["bk"] = jnp.ones((1, hidden_dim)), jnp.zeros((1, hidden_dim))
    # norm_v + attention value / output projections (the live path)
    p["gv"], p["bv"] = jnp.ones((1, hidden_dim)), jnp.zeros((1, hidden_dim))
    p["wv"], p["bv_lin"] = linear(keys[6], hidden_dim, dim)
    p["wp"], p["bp"] = linear(keys[7], dim, dim)
    return p


def pack_params(params, weight_dtype=jnp.float32):
    """One-time constant folding + packing (hoisted out of the per-call path).

    Folds norm_v's affine, the attention value projection and the output
    projection into a single (H, dim) weight + (1, dim) bias (exact identity),
    and packs the remaining small bias vectors into one (8, P) slab so the
    kernel issues a single small-operand DMA.

    weight_dtype=jnp.bfloat16 halves operand DMA bytes / VMEM footprint (the
    dots keep preferred_element_type=f32); meaningful once H/dim grow.
    """
    hidden = params["w2"].shape[1]
    dim = params["wp"].shape[0]

    # Wfused = diag(gv) · Wv · Wp ; b_fused = bv·Wv·Wp + bv_lin·Wp + bp
    wfused = (params["gv"][0][:, None] * params["wv"]) @ params["wp"]          # (H, dim)
    bfused = (params["bv"] @ params["wv"] + params["bv_lin"]) @ params["wp"] \
        + params["bp"]                                                          # (1, dim)

    p_lanes = ((max(128, hidden, dim) + 127) // 128) * 128
    vec = jnp.zeros((8, p_lanes), jnp.float32)
    vec = vec.at[0, :128].set(params["b1"][0])
    vec = vec.at[1, :hidden].set(params["b2"][0])
    vec = vec.at[2, :hidden].set(params["b3"][0])
    vec = vec.at[3, :dim].set(bfused[0])

    return {
        "w1": params["w1"].astype(weight_dtype),
        "w2": params["w2"].astype(weight_dtype),
        "w3": params["w3"].astype(weight_dtype),
        "wfused": wfused.astype(weight_dtype),
        "vec": vec,
    }


@jax.jit
def query_gen_transformer_pe(inp, packed):
    """inp: (1, N, 2) (or (N, 2)); returns (1, dim, dim) like the torch module."""
    inp2 = inp.reshape(-1, 2)                       # robust vs. squeeze() when N == 1
    n = inp2.shape[0]
    dim = packed["wfused"].shape[1]

    # Fold the (compile-time-constant) positional embedding into the input and
    # keep only the live Y branch: Y_pe[i] = inp[i, 1] + cos(i).  Under jit the
    # cos(arange) is constant-folded by XLA.
    pos = jnp.arange(n, dtype=jnp.float32)
    y_pe = (inp2[:, 1] + jnp.cos(pos))[None, :]     # (1, N)

    args = (y_pe, packed["w1"], packed["w2"], packed["w3"],
            packed["wfused"], packed["vec"])

    # Explicit VMEM budget (padded operands + output, 2x double-buffer safety,
    # 2 MiB headroom), clamped to 48 MiB to leave Mosaic internal-scratch room
    # under v7x's 64 MiB physical VMEM.
    vmem_bytes = sum(_padded_f32_bytes(a.shape) for a in args)
    vmem_bytes += _padded_f32_bytes((dim, dim))
    vmem_bytes = int(min(max(2 * vmem_bytes + (2 << 20), 4 << 20), 48 << 20))

    out = pl.pallas_call(
        _query_gen_kernel,
        out_shape=jax.ShapeDtypeStruct((dim, dim), jnp.float32),
        in_specs=[pl.BlockSpec(memory_space=pltpu.MemorySpace.VMEM)
                  for _ in args],
        out_specs=pl.BlockSpec(memory_space=pltpu.MemorySpace.VMEM),
        compiler_params=pltpu.CompilerParams(vmem_limit_bytes=vmem_bytes),
    )(*args)

    return out[None, :, :]


def reference(inp, params, dim):
    """Pure-JAX reference of the same forward, using the UNFUSED parameters
    (checks both the kernel and the compile-time weight fusion)."""
    inp2 = inp.reshape(-1, 2)                 # (N, 2)
    n = inp2.shape[0]
    pos = jnp.arange(n, dtype=jnp.float32)[:, None]
    pe = jnp.concatenate([jnp.sin(pos), jnp.cos(pos)], axis=1)
    z = (inp2 + pe)[None]                     # (1, N, 2)
    Y = z[:, :, 1]

    def mlp(v):
        h = jnp.where((t := v @ params["w1"] + params["b1"]) >= 0, t, 0.01 * t)
        h = jnp.where((t := h @ params["w2"] + params["b2"]) >= 0, t, 0.01 * t)
        return h @ params["w3"] + params["b3"]

    def ln(x, g, b):
        m = x.mean(-1, keepdims=True)
        v = ((x - m) ** 2).mean(-1, keepdims=True)
        return (x - m) / jnp.sqrt(v + 1e-5) * g + b

    V = ln(mlp(Y), params["gv"], params["bv"])
    values = V @ params["wv"] + params["bv_lin"]           # (1, dim)
    att = jnp.broadcast_to(values, (dim, dim))             # softmax over 1 key == 1
    return (att @ params["wp"] + params["bp"])[None]


if __name__ == "__main__":
    INPUT_DIM = 32          # module input_dim  -> N = 16 sample pairs
    DIM = 16                # heads=8 -> head_dim=2
    HIDDEN = 64             # hidden_dim (small test size)
    N = INPUT_DIM // 2

    key = jax.random.PRNGKey(0)
    k_inp, k_par = jax.random.split(key)
    inp = jax.random.normal(k_inp, (1, N, 2), jnp.float32)
    params = init_params(k_par, INPUT_DIM, DIM, HIDDEN)

    # One-time constant folding / packing, then the jitted per-call path.
    packed = pack_params(params, weight_dtype=jnp.float32)

    out = query_gen_transformer_pe(inp, packed)
    out = jax.block_until_ready(out)

    ref = reference(inp, params, DIM)
    assert out.shape == (1, DIM, DIM), out.shape
    if not np.allclose(np.asarray(out), np.asarray(ref), rtol=1e-2, atol=1e-2):
        raise AssertionError("Pallas kernel disagrees with pure-JAX reference")
    print("KERNEL_OK")
</pallas_src>

<mosaic_0001>
module attributes {stable_mosaic.version = 11 : i64} {
  func.func @_query_gen_kernel(%arg0: memref<1x16xf32, #tpu.memory_space<vmem>>, %arg1: memref<16x128xf32, #tpu.memory_space<vmem>>, %arg2: memref<128x64xf32, #tpu.memory_space<vmem>>, %arg3: memref<64x64xf32, #tpu.memory_space<vmem>>, %arg4: memref<64x16xf32, #tpu.memory_space<vmem>>, %arg5: memref<8x128xf32, #tpu.memory_space<vmem>>, %arg6: memref<16x16xf32, #tpu.memory_space<vmem>>) attributes {dimension_semantics = [], scalar_prefetch = 0 : i64, scratch_operands = 0 : i64, tpu.core_type = #tpu.core_type<tc>} {
    %c0 = arith.constant 0 : index
    %c0_0 = arith.constant 0 : index
    %0 = vector.load %arg5[%c0, %c0_0] : memref<8x128xf32, #tpu.memory_space<vmem>>, vector<1x128xf32>
    %c1 = arith.constant 1 : index
    %c0_1 = arith.constant 0 : index
    %1 = vector.load %arg5[%c1, %c0_1] : memref<8x128xf32, #tpu.memory_space<vmem>>, vector<1x64xf32>
    %c2 = arith.constant 2 : index
    %c0_2 = arith.constant 0 : index
    %2 = vector.load %arg5[%c2, %c0_2] : memref<8x128xf32, #tpu.memory_space<vmem>>, vector<1x64xf32>
    %c3 = arith.constant 3 : index
    %c0_3 = arith.constant 0 : index
    %3 = vector.load %arg5[%c3, %c0_3] : memref<8x128xf32, #tpu.memory_space<vmem>>, vector<1x16xf32>
    %c0_4 = arith.constant 0 : index
    %c0_5 = arith.constant 0 : index
    %4 = vector.load %arg0[%c0_4, %c0_5] : memref<1x16xf32, #tpu.memory_space<vmem>>, vector<1x16xf32>
    %c0_6 = arith.constant 0 : index
    %c0_7 = arith.constant 0 : index
    %5 = vector.load %arg1[%c0_6, %c0_7] : memref<16x128xf32, #tpu.memory_space<vmem>>, vector<16x128xf32>
    %cst = arith.constant dense<0.000000e+00> : vector<1x128xf32>
    %6 = tpu.matmul %4, %5, %cst {dimension_numbers = #tpu.dot_dimension_numbers<[1], [0], [0], [1], [0, 0, 1, 1], [], []>} : vector<1x16xf32>, vector<16x128xf32>, vector<1x128xf32> -> vector<1x128xf32>
    %7 = arith.addf %6, %0 : vector<1x128xf32>
    %cst_8 = arith.constant 0.000000e+00 : f32
    %8 = vector.broadcast %cst_8 : f32 to vector<1x128xf32>
    %9 = arith.cmpf oge, %7, %8 : vector<1x128xf32>
    %cst_9 = arith.constant 0.00999999977 : f32
    %10 = vector.broadcast %cst_9 : f32 to vector<1x128xf32>
    %11 = arith.mulf %10, %7 : vector<1x128xf32>
    %12 = arith.select %9, %7, %11 : vector<1x128xi1>, vector<1x128xf32>
    %c0_10 = arith.constant 0 : index
    %c0_11 = arith.constant 0 : index
    %13 = vector.load %arg2[%c0_10, %c0_11] : memref<128x64xf32, #tpu.memory_space<vmem>>, vector<128x64xf32>
    %cst_12 = arith.constant dense<0.000000e+00> : vector<1x64xf32>
    %14 = tpu.matmul %12, %13, %cst_12 {dimension_numbers = #tpu.dot_dimension_numbers<[1], [0], [0], [1], [0, 0, 1, 1], [], []>} : vector<1x128xf32>, vector<128x64xf32>, vector<1x64xf32> -> vector<1x64xf32>
    %15 = arith.addf %14, %1 : vector<1x64xf32>
    %cst_13 = arith.constant 0.000000e+00 : f32
    %16 = vector.broadcast %cst_13 : f32 to vector<1x64xf32>
    %17 = arith.cmpf oge, %15, %16 : vector<1x64xf32>
    %cst_14 = arith.constant 0.00999999977 : f32
    %18 = vector.broadcast %cst_14 : f32 to vector<1x64xf32>
    %19 = arith.mulf %18, %15 : vector<1x64xf32>
    %20 = arith.select %17, %15, %19 : vector<1x64xi1>, vector<1x64xf32>
    %c0_15 = arith.constant 0 : index
    %c0_16 = arith.constant 0 : index
    %21 = vector.load %arg3[%c0_15, %c0_16] : memref<64x64xf32, #tpu.memory_space<vmem>>, vector<64x64xf32>
    %cst_17 = arith.constant dense<0.000000e+00> : vector<1x64xf32>
    %22 = tpu.matmul %20, %21, %cst_17 {dimension_numbers = #tpu.dot_dimension_numbers<[1], [0], [0], [1], [0, 0, 1, 1], [], []>} : vector<1x64xf32>, vector<64x64xf32>, vector<1x64xf32> -> vector<1x64xf32>
    %23 = arith.addf %22, %2 : vector<1x64xf32>
    %cst_18 = arith.constant dense<0.000000e+00> : vector<1xf32>
    %24 = vector.multi_reduction <add>, %23, %cst_18 [1] : vector<1x64xf32> to vector<1xf32>
    %25 = vector.shape_cast %24 : vector<1xf32> to vector<1x1xf32>
    %cst_19 = arith.constant 6.400000e+01 : f32
    %26 = vector.broadcast %cst_19 : f32 to vector<1x1xf32>
    %27 = arith.divf %25, %26 : vector<1x1xf32>
    %28 = vector.broadcast %27 : vector<1x1xf32> to vector<1x64xf32>
    %29 = arith.subf %23, %28 : vector<1x64xf32>
    %30 = arith.mulf %29, %29 : vector<1x64xf32>
    %cst_20 = arith.constant dense<0.000000e+00> : vector<1xf32>
    %31 = vector.multi_reduction <add>, %30, %cst_20 [1] : vector<1x64xf32> to vector<1xf32>
    %32 = vector.shape_cast %31 : vector<1xf32> to vector<1x1xf32>
    %cst_21 = arith.constant 6.400000e+01 : f32
    %33 = vector.broadcast %cst_21 : f32 to vector<1x1xf32>
    %34 = arith.divf %32, %33 : vector<1x1xf32>
    %35 = vector.broadcast %27 : vector<1x1xf32> to vector<1x64xf32>
    %36 = arith.subf %23, %35 : vector<1x64xf32>
    %cst_22 = arith.constant 9.99999974E-6 : f32
    %37 = vector.broadcast %cst_22 : f32 to vector<1x1xf32>
    %38 = arith.addf %34, %37 : vector<1x1xf32>
    %39 = math.rsqrt %38 : vector<1x1xf32>
    %40 = vector.broadcast %39 : vector<1x1xf32> to vector<1x64xf32>
    %41 = arith.mulf %36, %40 : vector<1x64xf32>
    %c0_23 = arith.constant 0 : index
    %c0_24 = arith.constant 0 : index
    %42 = vector.load %arg4[%c0_23, %c0_24] : memref<64x16xf32, #tpu.memory_space<vmem>>, vector<64x16xf32>
    %cst_25 = arith.constant dense<0.000000e+00> : vector<1x16xf32>
    %43 = tpu.matmul %41, %42, %cst_25 {dimension_numbers = #tpu.dot_dimension_numbers<[1], [0], [0], [1], [0, 0, 1, 1], [], []>} : vector<1x64xf32>, vector<64x16xf32>, vector<1x16xf32> -> vector<1x16xf32>
    %44 = arith.addf %43, %3 : vector<1x16xf32>
    %45 = vector.shape_cast %44 : vector<1x16xf32> to vector<1x16xf32>
    %46 = vector.broadcast %45 : vector<1x16xf32> to vector<16x16xf32>
    %c0_26 = arith.constant 0 : index
    %c0_27 = arith.constant 0 : index
    %47 = vector.load %arg6[%c0_26, %c0_27] : memref<16x16xf32, #tpu.memory_space<vmem>>, vector<16x16xf32>
    tpu.vector_store %arg6[%c0_26, %c0_27], %46 {strides = array<i32>} : memref<16x16xf32, #tpu.memory_space<vmem>>, vector<16x16xf32>,
    return
  }
}

</mosaic_0001>

<llo_original>
// kernel: query_gen_transformer_pe.1
$region0: #{query_gen_transformer_pe.1}
  #allocation0 [shape = 'u32[]', space=smem, size = 0x4, offset = 0x4, fixed_abs, tag = 'smem constant byte address 0x4 - core index']
  #allocation1 [shape = 'u32[144,128]{1,0:T(1,128)}', space=vmem, size = 0x12000, scoped, tag = 'internal scratch']
  %s0 = inlined_call_operand.vmem [shape: f32[1,16], index: 0, kind: input, shape index: {}]
  %s1 = inlined_call_operand.vmem [shape: f32[16,128], index: 1, kind: input, shape index: {}]
  %s2 = inlined_call_operand.vmem [shape: f32[128,64], index: 2, kind: input, shape index: {}]
  %s3 = inlined_call_operand.vmem [shape: f32[64,64], index: 3, kind: input, shape index: {}]
  %s4 = inlined_call_operand.vmem [shape: f32[64,16], index: 4, kind: input, shape index: {}]
  %s5 = inlined_call_operand.vmem [shape: f32[8,128], index: 5, kind: input, shape index: {}]
  %s6 = inlined_call_operand.hbm [shape: f32[16,16], index: 6, kind: output, shape index: {}]
  %s7 = sld [smem:[#allocation0]]
  $region34: #{query_gen_transformer_pe.1} parent=0
    _
  %s9 = ssub.s32 1, %s7
  %s10 = scalar_select 0, %s9, %s7
  $region1: #{query_gen_transformer_pe.1} parent=0
    #allocation2 [shape = 'u8[8192]{0}', space=vmem, size = 0x2000, scoped, tag = 'output window, operand 0, single buffered']
    #allocation3 [shape = 's32[1]{0}', space=sflag, size = 0x4, scoped, tag = 'scoped memory for query_gen_transformer_pe.1']
    %11 = vsyncpa [#allocation3], 0
    // Predicated region
    $region2: #{query_gen_transformer_pe.1} parent=1 // pred_check
      _
    $region3: #{query_gen_transformer_pe.1} parent=1 // pred_check_branch
      %13 = sbr.rel (0) target = $region5
    $region4: #{query_gen_transformer_pe.1} parent=1 // pred_region
      _
    $region5: #{query_gen_transformer_pe.1} parent=1 // pred_fallthru
      _
    // Predicated region
    $region6: #{query_gen_transformer_pe.1} parent=1 // pred_check
      _
    $region7: #{query_gen_transformer_pe.1} parent=1 // pred_check_branch
      %15 = sbr.rel (0) target = $region9
    $region8: #{query_gen_transformer_pe.1} parent=1 // pred_region
      _
    $region9: #{query_gen_transformer_pe.1} parent=1 // pred_fallthru
      _
    // Predicated region
    $region10: #{query_gen_transformer_pe.1} parent=1 // pred_check
      _
    $region11: #{query_gen_transformer_pe.1} parent=1 // pred_check_branch
      %17 = sbr.rel (0) target = $region13
    $region12: #{query_gen_transformer_pe.1} parent=1 // pred_region
      _
    $region13: #{query_gen_transformer_pe.1} parent=1 // pred_fallthru
      _
    // Predicated region
    $region14: #{query_gen_transformer_pe.1} parent=1 // pred_check
      _
    $region15: #{query_gen_transformer_pe.1} parent=1 // pred_check_branch
      %19 = sbr.rel (0) target = $region17
    $region16: #{query_gen_transformer_pe.1} parent=1 // pred_region
      _
    $region17: #{query_gen_transformer_pe.1} parent=1 // pred_fallthru
      _
    // Predicated region
    $region18: #{query_gen_transformer_pe.1} parent=1 // pred_check
      _
    $region19: #{query_gen_transformer_pe.1} parent=1 // pred_check_branch
      %21 = sbr.rel (0) target = $region21
    $region20: #{query_gen_transformer_pe.1} parent=1 // pred_region
      _
    $region21: #{query_gen_transformer_pe.1} parent=1 // pred_fallthru
      _
    // Predicated region
    $region22: #{query_gen_transformer_pe.1} parent=1 // pred_check
      _
    $region23: #{query_gen_transformer_pe.1} parent=1 // pred_check_branch
      %23 = sbr.rel (0) target = $region25
    $region24: #{query_gen_transformer_pe.1} parent=1 // pred_region
      _
    $region25: #{query_gen_transformer_pe.1} parent=1 // pred_fallthru
      _
    %v24 = vld [vmem:[%s5] sm:$0x1]
    %v25 = vld [vmem:[%s5 + $0x1] sm:$0x1]
    %v26 = vld [vmem:[%s5 + $0x2] sm:$0x1]
    %v27 = vld [vmem:[%s5 + $0x3] sm:$0x1]
    %v28 = vld [vmem:[%s0] sm:$0x1]
    %v29 = vld [vmem:[%s1] sm:$0xff]
    %v30 = vld [vmem:[%s1 + $0x8] sm:$0xff]
    %vm31 = vcmask 130048
    %v33 = vsel %vm31, %v28, 0
    %35 = vmatprep.subr.mxu0 0.0
    %36 = vmatpush1.msra.mxu0 %v29
    %37 = vmatprep.subr.mxu0 0.0
    %38 = vmatpush1.msra.mxu0 %v30
    %39 = vmatprep.subr.mxu0 0.0
    %40 = vmatpush1.msra.mxu0 0.0
    %41 = vmatprep.subr.mxu0 0.0
    %42 = vmatpush1.msra.mxu0 0.0
    %43 = vmatprep.subr.mxu0 0.0
    %44 = vmatpush1.msra.mxu0 0.0
    %45 = vmatprep.subr.mxu0 0.0
    %46 = vmatpush1.msra.mxu0 0.0
    %47 = vmatprep.subr.mxu0 0.0
    %48 = vmatpush1.msra.mxu0 0.0
    %49 = vmatprep.subr.mxu0 0.0
    %50 = vmatpush1.msra.mxu0 0.0
    %51 = vmatprep.subr.mxu0 0.0
    %52 = vmatpush1.msra.mxu0 0.0
    %53 = vmatprep.subr.mxu0 0.0
    %54 = vmatpush1.msra.mxu0 0.0
    %55 = vmatprep.subr.mxu0 0.0
    %56 = vmatpush1.msra.mxu0 0.0
    %57 = vmatprep.subr.mxu0 0.0
    %58 = vmatpush1.msra.mxu0 0.0
    %59 = vmatprep.subr.mxu0 0.0
    %60 = vmatpush1.msra.mxu0 0.0
    %61 = vmatprep.subr.mxu0 0.0
    %62 = vmatpush1.msra.mxu0 0.0
    %63 = vmatprep.subr.mxu0 0.0
    %64 = vmatpush1.msra.mxu0 0.0
    %65 = vmatprep.subr.mxu0 0.0
    %66 = vmatpush1.msra.mxu0 0.0
    %67 = vmatprep.subr.mxu0 0.0
    %68 = vmatpush1.msra.mxu0 0.0
    %69 = vmatprep.subr.mxu0 0.0
    %70 = vmatpush1.msra.mxu0 0.0
    %71 = vmatprep.subr.mxu0 0.0
    %72 = vmatpush1.msra.mxu0 0.0
    %73 = vmatprep.subr.mxu0 0.0
    %74 = vmatpush1.msra.mxu0 0.0
    %75 = vmatprep.subr.mxu0 0.0
    %76 = vmatpush1.msra.mxu0 0.0
    %77 = vmatprep.subr.mxu0 0.0
    %78 = vmatpush1.msra.mxu0 0.0
    %79 = vmatprep.subr.mxu0 0.0
    %80 = vmatpush1.msra.mxu0 0.0
    %81 = vmatprep.subr.mxu0 0.0
    %82 = vmatpush1.msra.mxu0 0.0
    %83 = vmatprep.subr.mxu0 0.0
    %84 = vmatpush1.msra.mxu0 0.0
    %85 = vmatprep.subr.mxu0 0.0
    %86 = vmatpush1.msra.mxu0 0.0
    %87 = vmatprep.subr.mxu0 0.0
    %88 = vmatpush1.msra.mxu0 0.0
    %89 = vmatprep.subr.mxu0 0.0
    %90 = vmatpush1.msra.mxu0 0.0
    %91 = vmatprep.subr.mxu0 0.0
    %92 = vmatpush1.msra.mxu0 0.0
    %93 = vmatprep.subr.mxu0 0.0
    %94 = vmatpush1.msra.mxu0 0.0
    %95 = vmatprep.subr.mxu0 0.0
    %96 = vmatpush1.msra.mxu0 0.0
    %97 = vmatprep.subr.mxu0 0.0
    %98 = vmatpush1.msra.mxu0 0.0
    %99 = vmatprep.mubr.f32.mxu0 0.0
    %100 = vmatmul.mubr.f32.gmra.mrb[0].mxu0 %v33
    %v101 = vpop.f32.mrb[0].mxu0
    %v102 = vadd.f32 %v24, %v101
    %v103 = vpop.f32.mrb[0].mxu0
    %104 = vdwg.mxu0
    %vm105 = vcmp.ge.f32.partialorder %v102, 0.0
    %v106 = vmul.f32 %v102, 0.01
    %v107 = vsel %vm105, %v102, %v106
    %v108 = vld [vmem:[%s2] sm:$0xff]
    %v109 = vld [vmem:[%s2 + $0x8] sm:$0xff]
    %v110 = vld [vmem:[%s2 + $0x10] sm:$0xff]
    %v111 = vld [vmem:[%s2 + $0x18] sm:$0xff]
    %v112 = vld [vmem:[%s2 + $0x20] sm:$0xff]
    %v113 = vld [vmem:[%s2 + $0x28] sm:$0xff]
    %v114 = vld [vmem:[%s2 + $0x30] sm:$0xff]
    %v115 = vld [vmem:[%s2 + $0x38] sm:$0xff]
    %v116 = vld [vmem:[%s2 + $0x40] sm:$0xff]
    %v117 = vld [vmem:[%s2 + $0x48] sm:$0xff]
    %v118 = vld [vmem:[%s2 + $0x50] sm:$0xff]
    %v119 = vld [vmem:[%s2 + $0x58] sm:$0xff]
    %v120 = vld [vmem:[%s2 + $0x60] sm:$0xff]
    %v121 = vld [vmem:[%s2 + $0x68] sm:$0xff]
    %v122 = vld [vmem:[%s2 + $0x70] sm:$0xff]
    %v123 = vld [vmem:[%s2 + $0x78] sm:$0xff]
    %124 = vmatprep.subr.mxu0 0.0
    %125 = vmatpush1.msra.mxu0 %v108
    %126 = vmatprep.subr.mxu0 0.0
    %127 = vmatpush1.msra.mxu0 %v109
    %128 = vmatprep.subr.mxu0 0.0
    %129 = vmatpush1.msra.mxu0 %v110
    %130 = vmatprep.subr.mxu0 0.0
    %131 = vmatpush1.msra.mxu0 %v111
    %132 = vmatprep.subr.mxu0 0.0
    %133 = vmatpush1.msra.mxu0 %v112
    %134 = vmatprep.subr.mxu0 0.0
    %135 = vmatpush1.msra.mxu0 %v113
    %136 = vmatprep.subr.mxu0 0.0
    %137 = vmatpush1.msra.mxu0 %v114
    %138 = vmatprep.subr.mxu0 0.0
    %139 = vmatpush1.msra.mxu0 %v115
    %140 = vmatprep.subr.mxu0 0.0
    %141 = vmatpush1.msra.mxu0 %v116
    %142 = vmatprep.subr.mxu0 0.0
    %143 = vmatpush1.msra.mxu0 %v117
    %144 = vmatprep.subr.mxu0 0.0
    %145 = vmatpush1.msra.mxu0 %v118
    %146 = vmatprep.subr.mxu0 0.0
    %147 = vmatpush1.msra.mxu0 %v119
    %148 = vmatprep.subr.mxu0 0.0
    %149 = vmatpush1.msra.mxu0 %v120
    %150 = vmatprep.subr.mxu0 0.0
    %151 = vmatpush1.msra.mxu0 %v121
    %152 = vmatprep.subr.mxu0 0.0
    %153 = vmatpush1.msra.mxu0 %v122
    %154 = vmatprep.subr.mxu0 0.0
    %155 = vmatpush1.msra.mxu0 %v123
    %156 = vmatprep.subr.mxu0 0.0
    %157 = vmatpush1.msra.mxu0 0.0
    %158 = vmatprep.subr.mxu0 0.0
    %159 = vmatpush1.msra.mxu0 0.0
    %160 = vmatprep.subr.mxu0 0.0
    %161 = vmatpush1.msra.mxu0 0.0
    %162 = vmatprep.subr.mxu0 0.0
    %163 = vmatpush1.msra.mxu0 0.0
    %164 = vmatprep.subr.mxu0 0.0
    %165 = vmatpush1.msra.mxu0 0.0
    %166 = vmatprep.subr.mxu0 0.0
    %167 = vmatpush1.msra.mxu0 0.0
    %168 = vmatprep.subr.mxu0 0.0
    %169 = vmatpush1.msra.mxu0 0.0
    %170 = vmatprep.subr.mxu0 0.0
    %171 = vmatpush1.msra.mxu0 0.0
    %172 = vmatprep.subr.mxu0 0.0
    %173 = vmatpush1.msra.mxu0 0.0
    %174 = vmatprep.subr.mxu0 0.0
    %175 = vmatpush1.msra.mxu0 0.0
    %176 = vmatprep.subr.mxu0 0.0
    %177 = vmatpush1.msra.mxu0 0.0
    %178 = vmatprep.subr.mxu0 0.0
    %179 = vmatpush1.msra.mxu0 0.0
    %180 = vmatprep.subr.mxu0 0.0
    %181 = vmatpush1.msra.mxu0 0.0
    %182 = vmatprep.subr.mxu0 0.0
    %183 = vmatpush1.msra.mxu0 0.0
    %184 = vmatprep.subr.mxu0 0.0
    %185 = vmatpush1.msra.mxu0 0.0
    %186 = vmatprep.subr.mxu0 0.0
    %187 = vmatpush1.msra.mxu0 0.0
    %188 = vmatprep.mubr.f32.mxu0 0.0
    %189 = vmatmul.mubr.f32.gmra.mrb[0].mxu0 %v107
    %v190 = vpop.f32.mrb[0].mxu0
    %v191 = vadd.f32 %v25, %v190
    %v192 = vpop.f32.mrb[0].mxu0
    %193 = vdwg.mxu0
    %vm194 = vcmp.ge.f32.partialorder %v191, 0.0
    %v195 = vmul.f32 %v191, 0.01
    %v196 = vsel %vm194, %v191, %v195
    %v197 = vld [vmem:[%s3] sm:$0xff]
    %v198 = vld [vmem:[%s3 + $0x8] sm:$0xff]
    %v199 = vld [vmem:[%s3 + $0x10] sm:$0xff]
    %v200 = vld [vmem:[%s3 + $0x18] sm:$0xff]
    %v201 = vld [vmem:[%s3 + $0x20] sm:$0xff]
    %v202 = vld [vmem:[%s3 + $0x28] sm:$0xff]
    %v203 = vld [vmem:[%s3 + $0x30] sm:$0xff]
    %v204 = vld [vmem:[%s3 + $0x38] sm:$0xff]
    %vm205 = vcmask 523264
    %v207 = vsel %vm205, %v196, 0
    %209 = vmatprep.subr.mxu0 0.0
    %210 = vmatpush1.msra.mxu0 %v197
    %211 = vmatprep.subr.mxu0 0.0
    %212 = vmatpush1.msra.mxu0 %v198
    %213 = vmatprep.subr.mxu0 0.0
    %214 = vmatpush1.msra.mxu0 %v199
    %215 = vmatprep.subr.mxu0 0.0
    %216 = vmatpush1.msra.mxu0 %v200
    %217 = vmatprep.subr.mxu0 0.0
    %218 = vmatpush1.msra.mxu0 %v201
    %219 = vmatprep.subr.mxu0 0.0
    %220 = vmatpush1.msra.mxu0 %v202
    %221 = vmatprep.subr.mxu0 0.0
    %222 = vmatpush1.msra.mxu0 %v203
    %223 = vmatprep.subr.mxu0 0.0
    %224 = vmatpush1.msra.mxu0 %v204
    %225 = vmatprep.subr.mxu0 0.0
    %226 = vmatpush1.msra.mxu0 0.0
    %227 = vmatprep.subr.mxu0 0.0
    %228 = vmatpush1.msra.mxu0 0.0
    %229 = vmatprep.subr.mxu0 0.0
    %230 = vmatpush1.msra.mxu0 0.0
    %231 = vmatprep.subr.mxu0 0.0
    %232 = vmatpush1.msra.mxu0 0.0
    %233 = vmatprep.subr.mxu0 0.0
    %234 = vmatpush1.msra.mxu0 0.0
    %235 = vmatprep.subr.mxu0 0.0
    %236 = vmatpush1.msra.mxu0 0.0
    %237 = vmatprep.subr.mxu0 0.0
    %238 = vmatpush1.msra.mxu0 0.0
    %239 = vmatprep.subr.mxu0 0.0
    %240 = vmatpush1.msra.mxu0 0.0
    %241 = vmatprep.subr.mxu0 0.0
    %242 = vmatpush1.msra.mxu0 0.0
    %243 = vmatprep.subr.mxu0 0.0
    %244 = vmatpush1.msra.mxu0 0.0
    %245 = vmatprep.subr.mxu0 0.0
    %246 = vmatpush1.msra.mxu0 0.0
    %247 = vmatprep.subr.mxu0 0.0
    %248 = vmatpush1.msra.mxu0 0.0
    %249 = vmatprep.subr.mxu0 0.0
    %250 = vmatpush1.msra.mxu0 0.0
    %251 = vmatprep.subr.mxu0 0.0
    %252 = vmatpush1.msra.mxu0 0.0
    %253 = vmatprep.subr.mxu0 0.0
    %254 = vmatpush1.msra.mxu0 0.0
    %255 = vmatprep.subr.mxu0 0.0
    %256 = vmatpush1.msra.mxu0 0.0
    %257 = vmatprep.subr.mxu0 0.0
    %258 = vmatpush1.msra.mxu0 0.0
    %259 = vmatprep.subr.mxu0 0.0
    %260 = vmatpush1.msra.mxu0 0.0
    %261 = vmatprep.subr.mxu0 0.0
    %262 = vmatpush1.msra.mxu0 0.0
    %263 = vmatprep.subr.mxu0 0.0
    %264 = vmatpush1.msra.mxu0 0.0
    %265 = vmatprep.subr.mxu0 0.0
    %266 = vmatpush1.msra.mxu0 0.0
    %267 = vmatprep.subr.mxu0 0.0
    %268 = vmatpush1.msra.mxu0 0.0
    %269 = vmatprep.subr.mxu0 0.0
    %270 = vmatpush1.msra.mxu0 0.0
    %271 = vmatprep.subr.mxu0 0.0
    %272 = vmatpush1.msra.mxu0 0.0
    %273 = vmatprep.mubr.f32.mxu0 0.0
    %274 = vmatmul.mubr.f32.gmra.mrb[0].mxu0 %v207
    %v275 = vpop.f32.mrb[0].mxu0
    %v276 = vadd.f32 %v26, %v275
    %v277 = vpop.f32.mrb[0].mxu0
    %278 = vdwg.mxu0
    %vm279 = vcmask 516096
    %v280 = vsel %vm279, %v276, 0.0
    %281 = vadd.xlane.f32.xlu0 %v280
    %v282 = vpop.xlane.xlu0 %281
    %v283 = vrcp.pop 64.0
    %v284 = vmul.f32 %v282, %v283
    %v285 = vsub.f32 %v276, %v284
    %v286 = vmul.f32 %v285, %v285
    %v287 = vsel %vm279, %v286, 0.0
    %288 = vadd.xlane.f32.xlu0 %v287
    %v289 = vpop.xlane.xlu0 %288
    %v290 = vmul.f32 %v289, %v283
    %v291 = vadd.f32 %v290, 1e-05
    %v292 = vrsqrt.pop %v291
    %v293 = vmul.f32 %v285, %v292
    %v294 = vld [vmem:[%s4] sm:$0xff]
    %v295 = vld [vmem:[%s4 + $0x8] sm:$0xff]
    %v296 = vld [vmem:[%s4 + $0x10] sm:$0xff]
    %v297 = vld [vmem:[%s4 + $0x18] sm:$0xff]
    %v298 = vld [vmem:[%s4 + $0x20] sm:$0xff]
    %v299 = vld [vmem:[%s4 + $0x28] sm:$0xff]
    %v300 = vld [vmem:[%s4 + $0x30] sm:$0xff]
    %v301 = vld [vmem:[%s4 + $0x38] sm:$0xff]
    %v303 = vsel %vm205, %v293, 0
    %305 = vmatprep.subr.mxu0 0.0
    %306 = vmatpush1.msra.mxu0 %v294
    %307 = vmatprep.subr.mxu0 0.0
    %308 = vmatpush1.msra.mxu0 %v295
    %309 = vmatprep.subr.mxu0 0.0
    %310 = vmatpush1.msra.mxu0 %v296
    %311 = vmatprep.subr.mxu0 0.0
    %312 = vmatpush1.msra.mxu0 %v297
    %313 = vmatprep.subr.mxu0 0.0
    %314 = vmatpush1.msra.mxu0 %v298
    %315 = vmatprep.subr.mxu0 0.0
    %316 = vmatpush1.msra.mxu0 %v299
    %317 = vmatprep.subr.mxu0 0.0
    %318 = vmatpush1.msra.mxu0 %v300
    %319 = vmatprep.subr.mxu0 0.0
    %320 = vmatpush1.msra.mxu0 %v301
    %321 = vmatprep.subr.mxu0 0.0
    %322 = vmatpush1.msra.mxu0 0.0
    %323 = vmatprep.subr.mxu0 0.0
    %324 = vmatpush1.msra.mxu0 0.0
    %325 = vmatprep.subr.mxu0 0.0
    %326 = vmatpush1.msra.mxu0 0.0
    %327 = vmatprep.subr.mxu0 0.0
    %328 = vmatpush1.msra.mxu0 0.0
    %329 = vmatprep.subr.mxu0 0.0
    %330 = vmatpush1.msra.mxu0 0.0
    %331 = vmatprep.subr.mxu0 0.0
    %332 = vmatpush1.msra.mxu0 0.0
    %333 = vmatprep.subr.mxu0 0.0
    %334 = vmatpush1.msra.mxu0 0.0
    %335 = vmatprep.subr.mxu0 0.0
    %336 = vmatpush1.msra.mxu0 0.0
    %337 = vmatprep.subr.mxu0 0.0
    %338 = vmatpush1.msra.mxu0 0.0
    %339 = vmatprep.subr.mxu0 0.0
    %340 = vmatpush1.msra.mxu0 0.0
    %341 = vmatprep.subr.mxu0 0.0
    %342 = vmatpush1.msra.mxu0 0.0
    %343 = vmatprep.subr.mxu0 0.0
    %344 = vmatpush1.msra.mxu0 0.0
    %345 = vmatprep.subr.mxu0 0.0
    %346 = vmatpush1.msra.mxu0 0.0
    %347 = vmatprep.subr.mxu0 0.0
    %348 = vmatpush1.msra.mxu0 0.0
    %349 = vmatprep.subr.mxu0 0.0
    %350 = vmatpush1.msra.mxu0 0.0
    %351 = vmatprep.subr.mxu0 0.0
    %352 = vmatpush1.msra.mxu0 0.0
    %353 = vmatprep.subr.mxu0 0.0
    %354 = vmatpush1.msra.mxu0 0.0
    %355 = vmatprep.subr.mxu0 0.0
    %356 = vmatpush1.msra.mxu0 0.0
    %357 = vmatprep.subr.mxu0 0.0
    %358 = vmatpush1.msra.mxu0 0.0
    %359 = vmatprep.subr.mxu0 0.0
    %360 = vmatpush1.msra.mxu0 0.0
    %361 = vmatprep.subr.mxu0 0.0
    %362 = vmatpush1.msra.mxu0 0.0
    %363 = vmatprep.subr.mxu0 0.0
    %364 = vmatpush1.msra.mxu0 0.0
    %365 = vmatprep.subr.mxu0 0.0
    %366 = vmatpush1.msra.mxu0 0.0
    %367 = vmatprep.subr.mxu0 0.0
    %368 = vmatpush1.msra.mxu0 0.0
    %369 = vmatprep.mubr.f32.mxu0 0.0
    %370 = vmatmul.mubr.f32.gmra.mrb[0].mxu0 %v303
    %v371 = vpop.f32.mrb[0].mxu0
    %v372 = vadd.f32 %v27, %v371
    %v373 = vpop.f32.mrb[0].mxu0
    %374 = vdwg.mxu0
    %v375 = vlaneseq
    %v376 = vshrl.u32 %v375, 7
    %v377 = vsub.s32 0, %v376
    %v378 = vrot.slane %v372, %v377
    %379 = vst.msk [vmem:[#allocation2] sm:$0xff] %vm31, %v378
    %380 = vst.msk [vmem:[#allocation2 + $0x8] sm:$0xff] %vm31, %v378
    // Predicated region
    $region26: #{query_gen_transformer_pe.1} parent=1 // pred_check
      _
    $region27: #{query_gen_transformer_pe.1} parent=1 // pred_check_branch
      %382 = sbr.rel (0) target = $region29
    $region28: #{query_gen_transformer_pe.1} parent=1 // pred_region
      %s384 = ssub.s32 256, 256
      %385 = vsyncadd [#allocation3], %s384
      %s386 = sshll.u32 [#allocation2], 4
      %s387 = int_to_ptr.vmem [resolvable:$true] %s386
      %392 = dma.vmem_to_hbm [thread:$0]  %s387, 256, %s6, [#allocation3], 128, 128, 8
    $region29: #{query_gen_transformer_pe.1} parent=1 // pred_fallthru
      _
    // Predicated region
    $region30: #{query_gen_transformer_pe.1} parent=1 // pred_check
      _
    $region31: #{query_gen_transformer_pe.1} parent=1 // pred_check_branch
      %394 = sbr.rel (0) target = $region33
    $region32: #{query_gen_transformer_pe.1} parent=1 // pred_region
      %395 = dma.done [#allocation3], 256
    $region33: #{query_gen_transformer_pe.1} parent=1 // pred_fallthru
      _
    %396 = vsyncpa [#allocation3], 1

</llo_original>
